<compile_context>
chip_gen: v6e
topology: v6e:2x2x1
jax: 0.10.0
libtpu: 0.0.40
codegen_flags: <defaults>
</compile_context>

<pallas_src>
import jax
import jax.numpy as jnp
from jax import lax
from jax.experimental import pallas as pl
from jax.experimental.pallas import tpu as pltpu


def _round_up(x, m):
    return ((x + m - 1) // m) * m


def _emb_sum_kernel(ids_ref, tab_ref, out_ref):
    """out = tab[word_id] + tab[prefix_id] + tab[suffix_id] for one token tile.

    ids_ref : (tile_n, 3) int32, ids already offset into the fused table.
    tab_ref : (total_rows, D) fused [word | prefix | suffix] table
              (whole-array, single-buffered VMEM operand).
    out_ref : (tile_n, D) in the table's native dtype.
    """
    ids = ids_ref[...]                                  # (tile_n, 3)
    tab = tab_ref[...]                                  # (total_rows, D)
    tile_n = ids.shape[0]
    total_rows = tab.shape[0]

    # Single shared column-index iota per grid step.
    col = lax.broadcasted_iota(jnp.int32, (tile_n, total_rows), 1)

    # Multi-hot with exactly three ones per row (offset id ranges are
    # disjoint): fused ORs + one cast into the table dtype, so a bf16 table
    # runs as a native bf16 MXU matmul.
    # TODO(synk): out-of-range / negative ids silently give an all-zero row
    # here instead of raising like nn.Embedding's index check.
    multihot = ((ids[:, 0:1] == col)
                | (ids[:, 1:2] == col)
                | (ids[:, 2:3] == col)).astype(tab.dtype)

    # One MXU matmul replaces three gathers + two adds.  Pin precision for f32
    # tables so the one-hot "gather" is bit-exact against the table rows.
    precision = (lax.Precision.HIGHEST
                 if tab.dtype == jnp.float32 else lax.Precision.DEFAULT)
    out = jnp.dot(multihot, tab, preferred_element_type=jnp.float32,
                  precision=precision)
    out_ref[...] = out.astype(out_ref.dtype)


def fuse_embedding_tables(word_tab, prefix_tab, suffix_tab):
    """Module-init-time fusion (hoisted out of the forward path).

    Rows are [word | prefix | suffix]; all tables cast to a common dtype.
    """
    dtype = jnp.result_type(word_tab, prefix_tab, suffix_tab)
    return jnp.concatenate(
        [word_tab.astype(dtype), prefix_tab.astype(dtype),
         suffix_tab.astype(dtype)], axis=0)


def _vmem_budget_bytes():
    """~85% of the per-core VMEM capacity (conservative 64 MiB fallback)."""
    cap = 64 << 20                         # v7x per-TC VMEM (smallest of the 3)
    try:
        cap = int(pltpu.get_tpu_info().vmem_capacity_bytes)
    except Exception:
        pass
    return (cap * 85) // 100


def embeddings_with_prefix_suffix(words, prefixes, suffixes, fused_tab,
                                  vocab_size, prefix_size, *, tile_n=512):
    """Pallas equivalent of EmbeddingsWithPrefixSuffix.forward.

    fused_tab must come from fuse_embedding_tables(); the output dtype follows
    fused_tab.dtype (bf16 tables -> bf16 output).
    """
    B, S = words.shape
    total_rows, D = fused_tab.shape
    N = B * S
    out_dtype = fused_tab.dtype

    # Single (N, 3) int32 id stream, offset into the fused table.
    ids = jnp.stack(
        [words.reshape(N).astype(jnp.int32),
         prefixes.reshape(N).astype(jnp.int32) + vocab_size,
         suffixes.reshape(N).astype(jnp.int32) + vocab_size + prefix_size],
        axis=1)

    # Big, lane/sublane-dense output tiles (kernel is HBM-write bound); keep a
    # multiple of 8 sublanes and don't blow up tiny inputs.  The ragged last
    # tile is handled by Pallas itself (no padding, no post-kernel slice).
    tile_n = int(max(8, min(_round_up(int(tile_n), 8), _round_up(N, 8))))
    grid_n = -(-N // tile_n)               # cdiv

    # VMEM budget: single-buffered resident table + double-buffered id/output
    # tiles, with headroom, capped at ~85% of per-core VMEM.
    tab_bytes = total_rows * D * fused_tab.dtype.itemsize
    tile_bytes = 2 * tile_n * (D * jnp.dtype(out_dtype).itemsize + 3 * 4)
    needed = tab_bytes + tile_bytes
    vmem_limit = int(min(_vmem_budget_bytes(),
                         max(2 * needed + (4 << 20), 16 << 20)))

    out_flat = pl.pallas_call(
        _emb_sum_kernel,
        out_shape=jax.ShapeDtypeStruct((N, D), out_dtype),
        grid_spec=pltpu.PrefetchScalarGridSpec(
            num_scalar_prefetch=0,
            grid=(grid_n,),
            in_specs=[
                # Fused ids: one small DMA per token tile.
                pl.BlockSpec((tile_n, 3), lambda i: (i, 0)),
                # Invariant fused table: whole-array VMEM operand, copied in
                # once, not double-buffered.
                pl.BlockSpec(memory_space=pltpu.MemorySpace.VMEM),
            ],
            out_specs=pl.BlockSpec((tile_n, D), lambda i: (i, 0)),
        ),
        compiler_params=pltpu.CompilerParams(
            # Independent token tiles -> megacore sharding on v7x.
            dimension_semantics=("parallel",),
            vmem_limit_bytes=vmem_limit),
    )(ids, fused_tab)

    # (N, D) -> (B, S, D) reshape is free (no slice needed).
    return out_flat.reshape(B, S, D)


def _init_embedding(key, num_embeddings, emb_dim, padding_idx=0):
    """Deterministic nn.Embedding-style init; padding_idx row set to zero."""
    tab = jax.random.normal(key, (num_embeddings, emb_dim), dtype=jnp.float32)
    return tab.at[padding_idx].set(0.0)


if __name__ == "__main__":
    vocab_size, prefix_size, suffix_size = 32, 16, 16
    emb_dim = 128
    padding_idx = 0

    key = jax.random.PRNGKey(0)
    k_w, k_p, k_s, k_i0, k_i1, k_i2, k_j0, k_j1, k_j2 = jax.random.split(key, 9)

    word_tab = _init_embedding(k_w, vocab_size, emb_dim, padding_idx)
    prefix_tab = _init_embedding(k_p, prefix_size, emb_dim, padding_idx)
    suffix_tab = _init_embedding(k_s, suffix_size, emb_dim, padding_idx)

    # "Module init": fuse the tables once, outside the forward path.
    fused_f32 = fuse_embedding_tables(word_tab, prefix_tab, suffix_tab)

    # Case 1: B*S multiple of 8.
    B, S = 2, 8
    words = jax.random.randint(k_i0, (B, S), 0, vocab_size, dtype=jnp.int32)
    prefixes = jax.random.randint(k_i1, (B, S), 0, prefix_size, dtype=jnp.int32)
    suffixes = jax.random.randint(k_i2, (B, S), 0, suffix_size, dtype=jnp.int32)

    out = embeddings_with_prefix_suffix(
        words, prefixes, suffixes, fused_f32, vocab_size, prefix_size)
    out = jax.block_until_ready(out)
    ref = word_tab[words] + prefix_tab[prefixes] + suffix_tab[suffixes]
    assert out.shape == (B, S, emb_dim) and out.dtype == jnp.float32
    assert jnp.allclose(out, ref, atol=1e-5, rtol=1e-5), "mismatch vs reference"

    # Case 2: ragged token count (N = 15 -> partial last tile, no pad/slice).
    B2, S2 = 3, 5
    words2 = jax.random.randint(k_j0, (B2, S2), 0, vocab_size, dtype=jnp.int32)
    prefixes2 = jax.random.randint(k_j1, (B2, S2), 0, prefix_size, dtype=jnp.int32)
    suffixes2 = jax.random.randint(k_j2, (B2, S2), 0, suffix_size, dtype=jnp.int32)

    out2 = embeddings_with_prefix_suffix(
        words2, prefixes2, suffixes2, fused_f32, vocab_size, prefix_size)
    out2 = jax.block_until_ready(out2)
    ref2 = word_tab[words2] + prefix_tab[prefixes2] + suffix_tab[suffixes2]
    assert out2.shape == (B2, S2, emb_dim)
    assert jnp.allclose(out2, ref2, atol=1e-5, rtol=1e-5), "mismatch (ragged N)"

    # Case 3: bf16 tables -> bf16 output, native bf16 MXU matmul.
    fused_bf16 = fused_f32.astype(jnp.bfloat16)
    out3 = embeddings_with_prefix_suffix(
        words, prefixes, suffixes, fused_bf16, vocab_size, prefix_size)
    out3 = jax.block_until_ready(out3)
    assert out3.shape == (B, S, emb_dim) and out3.dtype == jnp.bfloat16
    assert jnp.allclose(out3.astype(jnp.float32), ref, atol=1e-1, rtol=5e-2), \
        "mismatch vs reference (bf16 table)"

    print("KERNEL_OK")
</pallas_src>

<mosaic_0001>
module attributes {stable_mosaic.version = 11 : i64} {
  func.func @_emb_sum_kernel(%arg0: i32, %arg1: memref<16x3xi32, #tpu.memory_space<vmem>>, %arg2: memref<64x128xf32, #tpu.memory_space<vmem>>, %arg3: memref<16x128xf32, #tpu.memory_space<vmem>>) attributes {dimension_semantics = [#tpu.dimension_semantics<parallel>], iteration_bounds = array<i64: 1>, scalar_prefetch = 0 : i64, scratch_operands = 0 : i64, tpu.core_type = #tpu.core_type<tc>, window_params = [{transform_indices = @transform_0, window_bounds = array<i64: 16, 3>}, {pipeline_mode = #tpu.pipeline_mode<synchronous>, transform_indices = @transform_1, window_bounds = array<i64: 64, 128>}, {transform_indices = @transform_2, window_bounds = array<i64: 16, 128>}]} {
    %c0 = arith.constant 0 : index
    %c0_0 = arith.constant 0 : index
    %0 = vector.load %arg1[%c0, %c0_0] : memref<16x3xi32, #tpu.memory_space<vmem>>, vector<16x3xi32>
    %c0_1 = arith.constant 0 : index
    %c0_2 = arith.constant 0 : index
    %1 = vector.load %arg2[%c0_1, %c0_2] : memref<64x128xf32, #tpu.memory_space<vmem>>, vector<64x128xf32>
    %2 = tpu.iota {dimensions = array<i32: 1>} : vector<16x64xi32>
    %3 = vector.extract_strided_slice %0 {offsets = [0, 0], sizes = [16, 1], strides = [1, 1]} : vector<16x3xi32> to vector<16x1xi32>
    %4 = vector.broadcast %3 : vector<16x1xi32> to vector<16x64xi32>
    %5 = arith.cmpi eq, %4, %2 : vector<16x64xi32>
    %6 = vector.extract_strided_slice %0 {offsets = [0, 1], sizes = [16, 1], strides = [1, 1]} : vector<16x3xi32> to vector<16x1xi32>
    %7 = vector.broadcast %6 : vector<16x1xi32> to vector<16x64xi32>
    %8 = arith.cmpi eq, %7, %2 : vector<16x64xi32>
    %9 = arith.ori %5, %8 : vector<16x64xi1>
    %10 = vector.extract_strided_slice %0 {offsets = [0, 2], sizes = [16, 1], strides = [1, 1]} : vector<16x3xi32> to vector<16x1xi32>
    %11 = vector.broadcast %10 : vector<16x1xi32> to vector<16x64xi32>
    %12 = arith.cmpi eq, %11, %2 : vector<16x64xi32>
    %13 = arith.ori %9, %12 : vector<16x64xi1>
    %14 = arith.extui %13 : vector<16x64xi1> to vector<16x64xi32>
    %15 = arith.sitofp %14 : vector<16x64xi32> to vector<16x64xf32>
    %cst = arith.constant dense<0.000000e+00> : vector<16x128xf32>
    %16 = tpu.matmul %15, %1, %cst {dimension_numbers = #tpu.dot_dimension_numbers<[1], [0], [0], [1], [0, 0, 1, 1], [], []>, precision = #tpu.contract_precision<fp32>} : vector<16x64xf32>, vector<64x128xf32>, vector<16x128xf32> -> vector<16x128xf32>
    %c0_3 = arith.constant 0 : index
    %c0_4 = arith.constant 0 : index
    %17 = vector.load %arg3[%c0_3, %c0_4] : memref<16x128xf32, #tpu.memory_space<vmem>>, vector<16x128xf32>
    tpu.vector_store %arg3[%c0_3, %c0_4], %16 {strides = array<i32>} : memref<16x128xf32, #tpu.memory_space<vmem>>, vector<16x128xf32>,
    return
  }
  func.func @transform_0(%arg0: i32) -> (i32, i32) {
    %c0_i32 = arith.constant 0 : i32
    %c0_i32_0 = arith.constant 0 : i32
    return %arg0, %c0_i32 : i32, i32
  }
  func.func @transform_1(%arg0: i32) -> (i32, i32) {
    %c0_i32 = arith.constant 0 : i32
    %c0_i32_0 = arith.constant 0 : i32
    %c0_i32_1 = arith.constant 0 : i32
    return %c0_i32, %c0_i32_0 : i32, i32
  }
  func.func @transform_2(%arg0: i32) -> (i32, i32) {
    %c0_i32 = arith.constant 0 : i32
    %c0_i32_0 = arith.constant 0 : i32
    return %arg0, %c0_i32 : i32, i32
  }
}

</mosaic_0001>

<llo_original>
// kernel: tpu_custom_call.1
$region0: #{tpu_custom_call.1}
  #allocation0 [shape = 'u32[]', space=smem, size = 0x4, offset = 0x4, fixed_abs, tag = 'smem constant byte address 0x4 - core index']
  #allocation1 [shape = 'u32[144,128]{1,0:T(1,128)}', space=vmem, size = 0x12000, scoped, tag = 'internal scratch']
  %s0 = inlined_call_operand.vmem [shape: s32[16,3], index: 0, kind: input, shape index: {}]
  %s1 = inlined_call_operand.hbm [shape: f32[64,128], index: 1, kind: input, shape index: {}]
  %s2 = inlined_call_operand.hbm [shape: f32[16,128], index: 2, kind: output, shape index: {}]
  %s3 = sld [smem:[#allocation0]]
  $region22: #{tpu_custom_call.1} parent=0
    _
  %s5 = ssub.s32 1, %s3
  %s6 = scalar_select 0, %s5, %s3
  $region1: #{tpu_custom_call.1} parent=0
    #allocation2 [shape = 'u8[32768]{0}', space=vmem, size = 0x8000, scoped, tag = 'input window, operand 1, single buffered']
    #allocation3 [shape = 's32[1]{0}', space=sflag, size = 0x4, scoped, tag = 'scoped memory for tpu_custom_call.1']
    #allocation4 [shape = 's32[1]{0}', space=sflag, size = 0x4, scoped, tag = 'scoped memory for tpu_custom_call.1']
    #allocation5 [shape = 'u8[8192]{0}', space=vmem, size = 0x2000, scoped, tag = 'output window, operand 0, single buffered']
    %7 = vsyncpa [#allocation3], 0
    %8 = vsyncpa [#allocation4], 0
    // Predicated region
    $region2: #{tpu_custom_call.1} parent=1 // pred_check
      _
    $region3: #{tpu_custom_call.1} parent=1 // pred_check_branch
      %10 = sbr.rel (0) target = $region5
    $region4: #{tpu_custom_call.1} parent=1 // pred_region
      _
    $region5: #{tpu_custom_call.1} parent=1 // pred_fallthru
      _
    // Predicated region
    $region6: #{tpu_custom_call.1} parent=1 // pred_check
      _
    $region7: #{tpu_custom_call.1} parent=1 // pred_check_branch
      %12 = sbr.rel (0) target = $region9
    $region8: #{tpu_custom_call.1} parent=1 // pred_region
      %s14 = ssub.s32 1024, 1024
      %15 = vsyncadd [#allocation3], %s14
      %s16 = sshll.u32 [#allocation2], 4
      %s17 = int_to_ptr.vmem [resolvable:$true] %s16
      %22 = dma.hbm_to_vmem [thread:$0]  %s1, 1024, %s17, [#allocation3], 128, 128, 8
    $region9: #{tpu_custom_call.1} parent=1 // pred_fallthru
      _
    // Predicated region
    $region10: #{tpu_custom_call.1} parent=1 // pred_check
      _
    $region11: #{tpu_custom_call.1} parent=1 // pred_check_branch
      %24 = sbr.rel (0) target = $region13
    $region12: #{tpu_custom_call.1} parent=1 // pred_region
      %25 = dma.done [#allocation3], 1024
    $region13: #{tpu_custom_call.1} parent=1 // pred_fallthru
      _
    %v26 = vld [vmem:[%s0] sm:$0xff]
    %v27 = vld [vmem:[%s0 + $0x8] sm:$0xff]
    %v28 = vld [vmem:[#allocation2] sm:$0xff]
    %v29 = vld [vmem:[#allocation2 + $0x8] sm:$0xff]
    %v30 = vld [vmem:[#allocation2 + $0x10] sm:$0xff]
    %v31 = vld [vmem:[#allocation2 + $0x18] sm:$0xff]
    %v32 = vld [vmem:[#allocation2 + $0x20] sm:$0xff]
    %v33 = vld [vmem:[#allocation2 + $0x28] sm:$0xff]
    %v34 = vld [vmem:[#allocation2 + $0x30] sm:$0xff]
    %v35 = vld [vmem:[#allocation2 + $0x38] sm:$0xff]
    %v36 = vlaneseq
    %v37 = vand.u32 %v36, 127
    %38 = vset.pattern.permute.xlu0 0
    %39 = vperm.xlu0 %38, %v26
    %v40 = vpop.permute.xlu0 %39
    %41 = vset.pattern.permute.xlu0 0
    %42 = vperm.xlu0 %41, %v27
    %v43 = vpop.permute.xlu0 %42
    %vm44 = vcmp.eq.s32.totalorder %v40, %v37
    %vm45 = vcmp.eq.s32.totalorder %v43, %v37
    %46 = vset.pattern.permute.xlu0 1
    %47 = vperm.xlu0 %46, %v26
    %v48 = vpop.permute.xlu0 %47
    %49 = vset.pattern.permute.xlu0 1
    %50 = vperm.xlu0 %49, %v27
    %v51 = vpop.permute.xlu0 %50
    %vm52 = vcmp.eq.s32.totalorder %v48, %v37
    %vm53 = vcmp.eq.s32.totalorder %v51, %v37
    %vm54 = vmor %vm44, %vm52
    %vm55 = vmor %vm45, %vm53
    %56 = vset.pattern.permute.xlu0 2
    %57 = vperm.xlu0 %56, %v26
    %v58 = vpop.permute.xlu0 %57
    %59 = vset.pattern.permute.xlu0 2
    %60 = vperm.xlu0 %59, %v27
    %v61 = vpop.permute.xlu0 %60
    %vm62 = vcmp.eq.s32.totalorder %v58, %v37
    %vm63 = vcmp.eq.s32.totalorder %v61, %v37
    %vm64 = vmor %vm54, %vm62
    %vm65 = vmor %vm55, %vm63
    %v66 = vsel %vm64, 1, 0
    %v67 = vsel %vm65, 1, 0
    %v68 = vcvt.s32.f32 %v66
    %v69 = vcvt.s32.f32 %v67
    %vm70 = vcmask 523264
    %v72 = vsel %vm70, %v68, 0
    %v75 = vsel %vm70, %v69, 0
    %77 = vmatprep.subr.mxu0 0.0
    %78 = vmatpush1.msra.mxu0 0.0
    %79 = vmatprep.subr.mxu0 0.0
    %80 = vmatpush1.msra.mxu0 0.0
    %81 = vmatprep.subr.mxu0 0.0
    %82 = vmatpush1.msra.mxu0 0.0
    %83 = vmatprep.subr.mxu0 0.0
    %84 = vmatpush1.msra.mxu0 0.0
    %85 = vmatprep.subr.mxu0 0.0
    %86 = vmatpush1.msra.mxu0 0.0
    %87 = vmatprep.subr.mxu0 0.0
    %88 = vmatpush1.msra.mxu0 0.0
    %89 = vmatprep.subr.mxu0 0.0
    %90 = vmatpush1.msra.mxu0 0.0
    %91 = vmatprep.subr.mxu0 0.0
    %92 = vmatpush1.msra.mxu0 0.0
    %93 = vmatprep.subr.mxu0 0.0
    %v94 = vand.u32 %v35, 4294901760
    %95 = vmatpush1.msra.mxu0 %v94
    %96 = vmatprep.subr.mxu0 0.0
    %v97 = vand.u32 %v34, 4294901760
    %98 = vmatpush1.msra.mxu0 %v97
    %99 = vmatprep.subr.mxu0 0.0
    %v100 = vand.u32 %v33, 4294901760
    %101 = vmatpush1.msra.mxu0 %v100
    %102 = vmatprep.subr.mxu0 0.0
    %v103 = vand.u32 %v32, 4294901760
    %104 = vmatpush1.msra.mxu0 %v103
    %105 = vmatprep.subr.mxu0 0.0
    %v106 = vand.u32 %v31, 4294901760
    %107 = vmatpush1.msra.mxu0 %v106
    %108 = vmatprep.subr.mxu0 0.0
    %v109 = vand.u32 %v30, 4294901760
    %110 = vmatpush1.msra.mxu0 %v109
    %111 = vmatprep.subr.mxu0 0.0
    %v112 = vand.u32 %v29, 4294901760
    %113 = vmatpush1.msra.mxu0 %v112
    %114 = vmatprep.subr.mxu0 0.0
    %v115 = vand.u32 %v28, 4294901760
    %116 = vmatpush1.msra.mxu0 %v115
    %117 = vmatprep.subr.mxu0 0.0
    %118 = vmatpush2.msra.mxu0 0.0
    %119 = vmatprep.subr.mxu0 0.0
    %120 = vmatpush2.msra.mxu0 0.0
    %121 = vmatprep.subr.mxu0 0.0
    %122 = vmatpush2.msra.mxu0 0.0
    %123 = vmatprep.subr.mxu0 0.0
    %124 = vmatpush2.msra.mxu0 0.0
    %125 = vmatprep.subr.mxu0 0.0
    %126 = vmatpush2.msra.mxu0 0.0
    %127 = vmatprep.subr.mxu0 0.0
    %128 = vmatpush2.msra.mxu0 0.0
    %129 = vmatprep.subr.mxu0 0.0
    %130 = vmatpush2.msra.mxu0 0.0
    %131 = vmatprep.subr.mxu0 0.0
    %132 = vmatpush2.msra.mxu0 0.0
    %133 = vmatprep.subr.mxu0 0.0
    %134 = vmatpush2.msra.mxu0 0.0
    %135 = vmatprep.subr.mxu0 0.0
    %136 = vmatpush2.msra.mxu0 0.0
    %137 = vmatprep.subr.mxu0 0.0
    %138 = vmatpush2.msra.mxu0 0.0
    %139 = vmatprep.subr.mxu0 0.0
    %140 = vmatpush2.msra.mxu0 0.0
    %141 = vmatprep.subr.mxu0 0.0
    %142 = vmatpush2.msra.mxu0 0.0
    %143 = vmatprep.subr.mxu0 0.0
    %144 = vmatpush2.msra.mxu0 0.0
    %145 = vmatprep.subr.mxu0 0.0
    %146 = vmatpush2.msra.mxu0 0.0
    %147 = vmatprep.subr.mxu0 0.0
    %148 = vmatpush2.msra.mxu0 0.0
    %149 = vmatprep.mubr.f32.mxu0 0.0
    %v150 = vand.u32 %v72, 4294901760
    %v151 = vsub.f32 %v72, %v150
    %v152 = vand.u32 %v151, 4294901760
    %v153 = vsub.f32 %v151, %v152
    %v154 = vand.u32 %v153, 4294901760
    %155 = vmatmul.mubr.f32.gmra.mxu0 %v154
    %v156 = vpop.f32.mrf.mxu0
    %v157 = vadd.f32 0.0, %v156
    %v158 = vpop.f32.mrf.mxu0
    %159 = vmatprep.mubr.f32.mxu0 0.0
    %v160 = vand.u32 %v75, 4294901760
    %v161 = vsub.f32 %v75, %v160
    %v162 = vand.u32 %v161, 4294901760
    %v163 = vsub.f32 %v161, %v162
    %v164 = vand.u32 %v163, 4294901760
    %165 = vmatmul.mubr.f32.gmra.mxu0 %v164
    %v166 = vpop.f32.mrf.mxu0
    %v167 = vadd.f32 0.0, %v166
    %v168 = vpop.f32.mrf.mxu0
    %169 = vdwg.mxu0
    %170 = vmatprep.subr.mxu0 0.0
    %171 = vmatpush1.msra.mxu0 0.0
    %172 = vmatprep.subr.mxu0 0.0
    %173 = vmatpush1.msra.mxu0 0.0
    %174 = vmatprep.subr.mxu0 0.0
    %175 = vmatpush1.msra.mxu0 0.0
    %176 = vmatprep.subr.mxu0 0.0
    %177 = vmatpush1.msra.mxu0 0.0
    %178 = vmatprep.subr.mxu0 0.0
    %179 = vmatpush1.msra.mxu0 0.0
    %180 = vmatprep.subr.mxu0 0.0
    %181 = vmatpush1.msra.mxu0 0.0
    %182 = vmatprep.subr.mxu0 0.0
    %183 = vmatpush1.msra.mxu0 0.0
    %184 = vmatprep.subr.mxu0 0.0
    %185 = vmatpush1.msra.mxu0 0.0
    %186 = vmatprep.subr.mxu0 0.0
    %v187 = vand.u32 %v35, 4294901760
    %v188 = vsub.f32 %v35, %v187
    %v189 = vand.u32 %v188, 4294901760
    %v190 = vsub.f32 %v188, %v189
    %v191 = vand.u32 %v190, 4294901760
    %192 = vmatpush1.msra.mxu0 %v191
    %193 = vmatprep.subr.mxu0 0.0
    %v194 = vand.u32 %v34, 4294901760
    %v195 = vsub.f32 %v34, %v194
    %v196 = vand.u32 %v195, 4294901760
    %v197 = vsub.f32 %v195, %v196
    %v198 = vand.u32 %v197, 4294901760
    %199 = vmatpush1.msra.mxu0 %v198
    %200 = vmatprep.subr.mxu0 0.0
    %v201 = vand.u32 %v33, 4294901760
    %v202 = vsub.f32 %v33, %v201
    %v203 = vand.u32 %v202, 4294901760
    %v204 = vsub.f32 %v202, %v203
    %v205 = vand.u32 %v204, 4294901760
    %206 = vmatpush1.msra.mxu0 %v205
    %207 = vmatprep.subr.mxu0 0.0
    %v208 = vand.u32 %v32, 4294901760
    %v209 = vsub.f32 %v32, %v208
    %v210 = vand.u32 %v209, 4294901760
    %v211 = vsub.f32 %v209, %v210
    %v212 = vand.u32 %v211, 4294901760
    %213 = vmatpush1.msra.mxu0 %v212
    %214 = vmatprep.subr.mxu0 0.0
    %v215 = vand.u32 %v31, 4294901760
    %v216 = vsub.f32 %v31, %v215
    %v217 = vand.u32 %v216, 4294901760
    %v218 = vsub.f32 %v216, %v217
    %v219 = vand.u32 %v218, 4294901760
    %220 = vmatpush1.msra.mxu0 %v219
    %221 = vmatprep.subr.mxu0 0.0
    %v222 = vand.u32 %v30, 4294901760
    %v223 = vsub.f32 %v30, %v222
    %v224 = vand.u32 %v223, 4294901760
    %v225 = vsub.f32 %v223, %v224
    %v226 = vand.u32 %v225, 4294901760
    %227 = vmatpush1.msra.mxu0 %v226
    %228 = vmatprep.subr.mxu0 0.0
    %v229 = vand.u32 %v29, 4294901760
    %v230 = vsub.f32 %v29, %v229
    %v231 = vand.u32 %v230, 4294901760
    %v232 = vsub.f32 %v230, %v231
    %v233 = vand.u32 %v232, 4294901760
    %234 = vmatpush1.msra.mxu0 %v233
    %235 = vmatprep.subr.mxu0 0.0
    %v236 = vand.u32 %v28, 4294901760
    %v237 = vsub.f32 %v28, %v236
    %v238 = vand.u32 %v237, 4294901760
    %v239 = vsub.f32 %v237, %v238
    %v240 = vand.u32 %v239, 4294901760
    %241 = vmatpush1.msra.mxu0 %v240
    %242 = vmatprep.subr.mxu0 0.0
    %243 = vmatpush2.msra.mxu0 0.0
    %244 = vmatprep.subr.mxu0 0.0
    %245 = vmatpush2.msra.mxu0 0.0
    %246 = vmatprep.subr.mxu0 0.0
    %247 = vmatpush2.msra.mxu0 0.0
    %248 = vmatprep.subr.mxu0 0.0
    %249 = vmatpush2.msra.mxu0 0.0
    %250 = vmatprep.subr.mxu0 0.0
    %251 = vmatpush2.msra.mxu0 0.0
    %252 = vmatprep.subr.mxu0 0.0
    %253 = vmatpush2.msra.mxu0 0.0
    %254 = vmatprep.subr.mxu0 0.0
    %255 = vmatpush2.msra.mxu0 0.0
    %256 = vmatprep.subr.mxu0 0.0
    %257 = vmatpush2.msra.mxu0 0.0
    %258 = vmatprep.subr.mxu0 0.0
    %259 = vmatpush2.msra.mxu0 0.0
    %260 = vmatprep.subr.mxu0 0.0
    %261 = vmatpush2.msra.mxu0 0.0
    %262 = vmatprep.subr.mxu0 0.0
    %263 = vmatpush2.msra.mxu0 0.0
    %264 = vmatprep.subr.mxu0 0.0
    %265 = vmatpush2.msra.mxu0 0.0
    %266 = vmatprep.subr.mxu0 0.0
    %267 = vmatpush2.msra.mxu0 0.0
    %268 = vmatprep.subr.mxu0 0.0
    %269 = vmatpush2.msra.mxu0 0.0
    %270 = vmatprep.subr.mxu0 0.0
    %271 = vmatpush2.msra.mxu0 0.0
    %272 = vmatprep.subr.mxu0 0.0
    %273 = vmatpush2.msra.mxu0 0.0
    %274 = vmatprep.mubr.f32.mxu0 0.0
    %v275 = vand.u32 %v72, 4294901760
    %276 = vmatmul.mubr.f32.gmra.mxu0 %v275
    %v277 = vpop.f32.mrf.mxu0
    %v278 = vadd.f32 %v157, %v277
    %v279 = vpop.f32.mrf.mxu0
    %280 = vmatprep.mubr.f32.mxu0 0.0
    %v281 = vand.u32 %v75, 4294901760
    %282 = vmatmul.mubr.f32.gmra.mxu0 %v281
    %v283 = vpop.f32.mrf.mxu0
    %v284 = vadd.f32 %v167, %v283
    %v285 = vpop.f32.mrf.mxu0
    %286 = vdwg.mxu0
    %287 = vmatprep.subr.mxu0 0.0
    %288 = vmatpush1.msra.mxu0 0.0
    %289 = vmatprep.subr.mxu0 0.0
    %290 = vmatpush1.msra.mxu0 0.0
    %291 = vmatprep.subr.mxu0 0.0
    %292 = vmatpush1.msra.mxu0 0.0
    %293 = vmatprep.subr.mxu0 0.0
    %294 = vmatpush1.msra.mxu0 0.0
    %295 = vmatprep.subr.mxu0 0.0
    %296 = vmatpush1.msra.mxu0 0.0
    %297 = vmatprep.subr.mxu0 0.0
    %298 = vmatpush1.msra.mxu0 0.0
    %299 = vmatprep.subr.mxu0 0.0
    %300 = vmatpush1.msra.mxu0 0.0
    %301 = vmatprep.subr.mxu0 0.0
    %302 = vmatpush1.msra.mxu0 0.0
    %303 = vmatprep.subr.mxu0 0.0
    %v304 = vand.u32 %v35, 4294901760
    %v305 = vsub.f32 %v35, %v304
    %306 = vmatpush1.msra.mxu0 %v305
    %307 = vmatprep.subr.mxu0 0.0
    %v308 = vand.u32 %v34, 4294901760
    %v309 = vsub.f32 %v34, %v308
    %310 = vmatpush1.msra.mxu0 %v309
    %311 = vmatprep.subr.mxu0 0.0
    %v312 = vand.u32 %v33, 4294901760
    %v313 = vsub.f32 %v33, %v312
    %314 = vmatpush1.msra.mxu0 %v313
    %315 = vmatprep.subr.mxu0 0.0
    %v316 = vand.u32 %v32, 4294901760
    %v317 = vsub.f32 %v32, %v316
    %318 = vmatpush1.msra.mxu0 %v317
    %319 = vmatprep.subr.mxu0 0.0
    %v320 = vand.u32 %v31, 4294901760
    %v321 = vsub.f32 %v31, %v320
    %322 = vmatpush1.msra.mxu0 %v321
    %323 = vmatprep.subr.mxu0 0.0
    %v324 = vand.u32 %v30, 4294901760
    %v325 = vsub.f32 %v30, %v324
    %326 = vmatpush1.msra.mxu0 %v325
    %327 = vmatprep.subr.mxu0 0.0
    %v328 = vand.u32 %v29, 4294901760
    %v329 = vsub.f32 %v29, %v328
    %330 = vmatpush1.msra.mxu0 %v329
    %331 = vmatprep.subr.mxu0 0.0
    %v332 = vand.u32 %v28, 4294901760
    %v333 = vsub.f32 %v28, %v332
    %334 = vmatpush1.msra.mxu0 %v333
    %335 = vmatprep.subr.mxu0 0.0
    %336 = vmatpush2.msra.mxu0 0.0
    %337 = vmatprep.subr.mxu0 0.0
    %338 = vmatpush2.msra.mxu0 0.0
    %339 = vmatprep.subr.mxu0 0.0
    %340 = vmatpush2.msra.mxu0 0.0
    %341 = vmatprep.subr.mxu0 0.0
    %342 = vmatpush2.msra.mxu0 0.0
    %343 = vmatprep.subr.mxu0 0.0
    %344 = vmatpush2.msra.mxu0 0.0
    %345 = vmatprep.subr.mxu0 0.0
    %346 = vmatpush2.msra.mxu0 0.0
    %347 = vmatprep.subr.mxu0 0.0
    %348 = vmatpush2.msra.mxu0 0.0
    %349 = vmatprep.subr.mxu0 0.0
    %350 = vmatpush2.msra.mxu0 0.0
    %351 = vmatprep.subr.mxu0 0.0
    %352 = vmatpush2.msra.mxu0 0.0
    %353 = vmatprep.subr.mxu0 0.0
    %354 = vmatpush2.msra.mxu0 0.0
    %355 = vmatprep.subr.mxu0 0.0
    %356 = vmatpush2.msra.mxu0 0.0
    %357 = vmatprep.subr.mxu0 0.0
    %358 = vmatpush2.msra.mxu0 0.0
    %359 = vmatprep.subr.mxu0 0.0
    %360 = vmatpush2.msra.mxu0 0.0
    %361 = vmatprep.subr.mxu0 0.0
    %362 = vmatpush2.msra.mxu0 0.0
    %363 = vmatprep.subr.mxu0 0.0
    %364 = vmatpush2.msra.mxu0 0.0
    %365 = vmatprep.subr.mxu0 0.0
    %366 = vmatpush2.msra.mxu0 0.0
    %367 = vmatprep.mubr.f32.mxu0 0.0
    %v368 = vand.u32 %v72, 4294901760
    %v369 = vsub.f32 %v72, %v368
    %370 = vmatmul.mubr.f32.gmra.mxu0 %v369
    %v371 = vpop.f32.mrf.mxu0
    %v372 = vadd.f32 %v278, %v371
    %v373 = vpop.f32.mrf.mxu0
    %374 = vmatprep.mubr.f32.mxu0 0.0
    %v375 = vand.u32 %v75, 4294901760
    %v376 = vsub.f32 %v75, %v375
    %377 = vmatmul.mubr.f32.gmra.mxu0 %v376
    %v378 = vpop.f32.mrf.mxu0
    %v379 = vadd.f32 %v284, %v378
    %v380 = vpop.f32.mrf.mxu0
    %381 = vdwg.mxu0
    %382 = vmatprep.subr.mxu0 0.0
    %383 = vmatpush1.msra.mxu0 0.0
    %384 = vmatprep.subr.mxu0 0.0
    %385 = vmatpush1.msra.mxu0 0.0
    %386 = vmatprep.subr.mxu0 0.0
    %387 = vmatpush1.msra.mxu0 0.0
    %388 = vmatprep.subr.mxu0 0.0
    %389 = vmatpush1.msra.mxu0 0.0
    %390 = vmatprep.subr.mxu0 0.0
    %391 = vmatpush1.msra.mxu0 0.0
    %392 = vmatprep.subr.mxu0 0.0
    %393 = vmatpush1.msra.mxu0 0.0
    %394 = vmatprep.subr.mxu0 0.0
    %395 = vmatpush1.msra.mxu0 0.0
    %396 = vmatprep.subr.mxu0 0.0
    %397 = vmatpush1.msra.mxu0 0.0
    %398 = vmatprep.subr.mxu0 0.0
    %v399 = vand.u32 %v35, 4294901760
    %400 = vmatpush1.msra.mxu0 %v399
    %401 = vmatprep.subr.mxu0 0.0
    %v402 = vand.u32 %v34, 4294901760
    %403 = vmatpush1.msra.mxu0 %v402
    %404 = vmatprep.subr.mxu0 0.0
    %v405 = vand.u32 %v33, 4294901760
    %406 = vmatpush1.msra.mxu0 %v405
    %407 = vmatprep.subr.mxu0 0.0
    %v408 = vand.u32 %v32, 4294901760
    %409 = vmatpush1.msra.mxu0 %v408
    %410 = vmatprep.subr.mxu0 0.0
    %v411 = vand.u32 %v31, 4294901760
    %412 = vmatpush1.msra.mxu0 %v411
    %413 = vmatprep.subr.mxu0 0.0
    %v414 = vand.u32 %v30, 4294901760
    %415 = vmatpush1.msra.mxu0 %v414
    %416 = vmatprep.subr.mxu0 0.0
    %v417 = vand.u32 %v29, 4294901760
    %418 = vmatpush1.msra.mxu0 %v417
    %419 = vmatprep.subr.mxu0 0.0
    %v420 = vand.u32 %v28, 4294901760
    %421 = vmatpush1.msra.mxu0 %v420
    %422 = vmatprep.subr.mxu0 0.0
    %423 = vmatpush2.msra.mxu0 0.0
    %424 = vmatprep.subr.mxu0 0.0
    %425 = vmatpush2.msra.mxu0 0.0
    %426 = vmatprep.subr.mxu0 0.0
    %427 = vmatpush2.msra.mxu0 0.0
    %428 = vmatprep.subr.mxu0 0.0
    %429 = vmatpush2.msra.mxu0 0.0
    %430 = vmatprep.subr.mxu0 0.0
    %431 = vmatpush2.msra.mxu0 0.0
    %432 = vmatprep.subr.mxu0 0.0
    %433 = vmatpush2.msra.mxu0 0.0
    %434 = vmatprep.subr.mxu0 0.0
    %435 = vmatpush2.msra.mxu0 0.0
    %436 = vmatprep.subr.mxu0 0.0
    %437 = vmatpush2.msra.mxu0 0.0
    %438 = vmatprep.subr.mxu0 0.0
    %439 = vmatpush2.msra.mxu0 0.0
    %440 = vmatprep.subr.mxu0 0.0
    %441 = vmatpush2.msra.mxu0 0.0
    %442 = vmatprep.subr.mxu0 0.0
    %443 = vmatpush2.msra.mxu0 0.0
    %444 = vmatprep.subr.mxu0 0.0
    %445 = vmatpush2.msra.mxu0 0.0
    %446 = vmatprep.subr.mxu0 0.0
    %447 = vmatpush2.msra.mxu0 0.0
    %448 = vmatprep.subr.mxu0 0.0
    %449 = vmatpush2.msra.mxu0 0.0
    %450 = vmatprep.subr.mxu0 0.0
    %451 = vmatpush2.msra.mxu0 0.0
    %452 = vmatprep.subr.mxu0 0.0
    %453 = vmatpush2.msra.mxu0 0.0
    %454 = vmatprep.mubr.f32.mxu0 0.0
    %v455 = vand.u32 %v72, 4294901760
    %v456 = vsub.f32 %v72, %v455
    %v457 = vand.u32 %v456, 4294901760
    %458 = vmatmul.mubr.f32.gmra.mxu0 %v457
    %v459 = vpop.f32.mrf.mxu0
    %v460 = vadd.f32 %v372, %v459
    %v461 = vpop.f32.mrf.mxu0
    %462 = vmatprep.mubr.f32.mxu0 0.0
    %v463 = vand.u32 %v75, 4294901760
    %v464 = vsub.f32 %v75, %v463
    %v465 = vand.u32 %v464, 4294901760
    %466 = vmatmul.mubr.f32.gmra.mxu0 %v465
    %v467 = vpop.f32.mrf.mxu0
    %v468 = vadd.f32 %v379, %v467
    %v469 = vpop.f32.mrf.mxu0
    %470 = vdwg.mxu0
    %471 = vmatprep.subr.mxu0 0.0
    %472 = vmatpush1.msra.mxu0 0.0
    %473 = vmatprep.subr.mxu0 0.0
    %474 = vmatpush1.msra.mxu0 0.0
    %475 = vmatprep.subr.mxu0 0.0
    %476 = vmatpush1.msra.mxu0 0.0
    %477 = vmatprep.subr.mxu0 0.0
    %478 = vmatpush1.msra.mxu0 0.0
    %479 = vmatprep.subr.mxu0 0.0
    %480 = vmatpush1.msra.mxu0 0.0
    %481 = vmatprep.subr.mxu0 0.0
    %482 = vmatpush1.msra.mxu0 0.0
    %483 = vmatprep.subr.mxu0 0.0
    %484 = vmatpush1.msra.mxu0 0.0
    %485 = vmatprep.subr.mxu0 0.0
    %486 = vmatpush1.msra.mxu0 0.0
    %487 = vmatprep.subr.mxu0 0.0
    %v488 = vand.u32 %v35, 4294901760
    %v489 = vsub.f32 %v35, %v488
    %v490 = vand.u32 %v489, 4294901760
    %491 = vmatpush1.msra.mxu0 %v490
    %492 = vmatprep.subr.mxu0 0.0
    %v493 = vand.u32 %v34, 4294901760
    %v494 = vsub.f32 %v34, %v493
    %v495 = vand.u32 %v494, 4294901760
    %496 = vmatpush1.msra.mxu0 %v495
    %497 = vmatprep.subr.mxu0 0.0
    %v498 = vand.u32 %v33, 4294901760
    %v499 = vsub.f32 %v33, %v498
    %v500 = vand.u32 %v499, 4294901760
    %501 = vmatpush1.msra.mxu0 %v500
    %502 = vmatprep.subr.mxu0 0.0
    %v503 = vand.u32 %v32, 4294901760
    %v504 = vsub.f32 %v32, %v503
    %v505 = vand.u32 %v504, 4294901760
    %506 = vmatpush1.msra.mxu0 %v505
    %507 = vmatprep.subr.mxu0 0.0
    %v508 = vand.u32 %v31, 4294901760
    %v509 = vsub.f32 %v31, %v508
    %v510 = vand.u32 %v509, 4294901760
    %511 = vmatpush1.msra.mxu0 %v510
    %512 = vmatprep.subr.mxu0 0.0
    %v513 = vand.u32 %v30, 4294901760
    %v514 = vsub.f32 %v30, %v513
    %v515 = vand.u32 %v514, 4294901760
    %516 = vmatpush1.msra.mxu0 %v515
    %517 = vmatprep.subr.mxu0 0.0
    %v518 = vand.u32 %v29, 4294901760
    %v519 = vsub.f32 %v29, %v518
    %v520 = vand.u32 %v519, 4294901760
    %521 = vmatpush1.msra.mxu0 %v520
    %522 = vmatprep.subr.mxu0 0.0
    %v523 = vand.u32 %v28, 4294901760
    %v524 = vsub.f32 %v28, %v523
    %v525 = vand.u32 %v524, 4294901760
    %526 = vmatpush1.msra.mxu0 %v525
    %527 = vmatprep.subr.mxu0 0.0
    %528 = vmatpush2.msra.mxu0 0.0
    %529 = vmatprep.subr.mxu0 0.0
    %530 = vmatpush2.msra.mxu0 0.0
    %531 = vmatprep.subr.mxu0 0.0
    %532 = vmatpush2.msra.mxu0 0.0
    %533 = vmatprep.subr.mxu0 0.0
    %534 = vmatpush2.msra.mxu0 0.0
    %535 = vmatprep.subr.mxu0 0.0
    %536 = vmatpush2.msra.mxu0 0.0
    %537 = vmatprep.subr.mxu0 0.0
    %538 = vmatpush2.msra.mxu0 0.0
    %539 = vmatprep.subr.mxu0 0.0
    %540 = vmatpush2.msra.mxu0 0.0
    %541 = vmatprep.subr.mxu0 0.0
    %542 = vmatpush2.msra.mxu0 0.0
    %543 = vmatprep.subr.mxu0 0.0
    %544 = vmatpush2.msra.mxu0 0.0
    %545 = vmatprep.subr.mxu0 0.0
    %546 = vmatpush2.msra.mxu0 0.0
    %547 = vmatprep.subr.mxu0 0.0
    %548 = vmatpush2.msra.mxu0 0.0
    %549 = vmatprep.subr.mxu0 0.0
    %550 = vmatpush2.msra.mxu0 0.0
    %551 = vmatprep.subr.mxu0 0.0
    %552 = vmatpush2.msra.mxu0 0.0
    %553 = vmatprep.subr.mxu0 0.0
    %554 = vmatpush2.msra.mxu0 0.0
    %555 = vmatprep.subr.mxu0 0.0
    %556 = vmatpush2.msra.mxu0 0.0
    %557 = vmatprep.subr.mxu0 0.0
    %558 = vmatpush2.msra.mxu0 0.0
    %559 = vmatprep.mubr.f32.mxu0 0.0
    %v560 = vand.u32 %v72, 4294901760
    %561 = vmatmul.mubr.f32.gmra.mxu0 %v560
    %v562 = vpop.f32.mrf.mxu0
    %v563 = vadd.f32 %v460, %v562
    %v564 = vpop.f32.mrf.mxu0
    %565 = vmatprep.mubr.f32.mxu0 0.0
    %v566 = vand.u32 %v75, 4294901760
    %567 = vmatmul.mubr.f32.gmra.mxu0 %v566
    %v568 = vpop.f32.mrf.mxu0
    %v569 = vadd.f32 %v468, %v568
    %v570 = vpop.f32.mrf.mxu0
    %571 = vdwg.mxu0
    %572 = vmatprep.subr.mxu0 0.0
    %573 = vmatpush1.msra.mxu0 0.0
    %574 = vmatprep.subr.mxu0 0.0
    %575 = vmatpush1.msra.mxu0 0.0
    %576 = vmatprep.subr.mxu0 0.0
    %577 = vmatpush1.msra.mxu0 0.0
    %578 = vmatprep.subr.mxu0 0.0
    %579 = vmatpush1.msra.mxu0 0.0
    %580 = vmatprep.subr.mxu0 0.0
    %581 = vmatpush1.msra.mxu0 0.0
    %582 = vmatprep.subr.mxu0 0.0
    %583 = vmatpush1.msra.mxu0 0.0
    %584 = vmatprep.subr.mxu0 0.0
    %585 = vmatpush1.msra.mxu0 0.0
    %586 = vmatprep.subr.mxu0 0.0
    %587 = vmatpush1.msra.mxu0 0.0
    %588 = vmatprep.subr.mxu0 0.0
    %v589 = vand.u32 %v35, 4294901760
    %590 = vmatpush1.msra.mxu0 %v589
    %591 = vmatprep.subr.mxu0 0.0
    %v592 = vand.u32 %v34, 4294901760
    %593 = vmatpush1.msra.mxu0 %v592
    %594 = vmatprep.subr.mxu0 0.0
    %v595 = vand.u32 %v33, 4294901760
    %596 = vmatpush1.msra.mxu0 %v595
    %597 = vmatprep.subr.mxu0 0.0
    %v598 = vand.u32 %v32, 4294901760
    %599 = vmatpush1.msra.mxu0 %v598
    %600 = vmatprep.subr.mxu0 0.0
    %v601 = vand.u32 %v31, 4294901760
    %602 = vmatpush1.msra.mxu0 %v601
    %603 = vmatprep.subr.mxu0 0.0
    %v604 = vand.u32 %v30, 4294901760
    %605 = vmatpush1.msra.mxu0 %v604
    %606 = vmatprep.subr.mxu0 0.0
    %v607 = vand.u32 %v29, 4294901760
    %608 = vmatpush1.msra.mxu0 %v607
    %609 = vmatprep.subr.mxu0 0.0
    %v610 = vand.u32 %v28, 4294901760
    %611 = vmatpush1.msra.mxu0 %v610
    %612 = vmatprep.subr.mxu0 0.0
    %613 = vmatpush2.msra.mxu0 0.0
    %614 = vmatprep.subr.mxu0 0.0
    %615 = vmatpush2.msra.mxu0 0.0
    %616 = vmatprep.subr.mxu0 0.0
    %617 = vmatpush2.msra.mxu0 0.0
    %618 = vmatprep.subr.mxu0 0.0
    %619 = vmatpush2.msra.mxu0 0.0
    %620 = vmatprep.subr.mxu0 0.0
    %621 = vmatpush2.msra.mxu0 0.0
    %622 = vmatprep.subr.mxu0 0.0
    %623 = vmatpush2.msra.mxu0 0.0
    %624 = vmatprep.subr.mxu0 0.0
    %625 = vmatpush2.msra.mxu0 0.0
    %626 = vmatprep.subr.mxu0 0.0
    %627 = vmatpush2.msra.mxu0 0.0
    %628 = vmatprep.subr.mxu0 0.0
    %629 = vmatpush2.msra.mxu0 0.0
    %630 = vmatprep.subr.mxu0 0.0
    %631 = vmatpush2.msra.mxu0 0.0
    %632 = vmatprep.subr.mxu0 0.0
    %633 = vmatpush2.msra.mxu0 0.0
    %634 = vmatprep.subr.mxu0 0.0
    %635 = vmatpush2.msra.mxu0 0.0
    %636 = vmatprep.subr.mxu0 0.0
    %637 = vmatpush2.msra.mxu0 0.0
    %638 = vmatprep.subr.mxu0 0.0
    %639 = vmatpush2.msra.mxu0 0.0
    %640 = vmatprep.subr.mxu0 0.0
    %641 = vmatpush2.msra.mxu0 0.0
    %642 = vmatprep.subr.mxu0 0.0
    %643 = vmatpush2.msra.mxu0 0.0
    %644 = vmatprep.mubr.f32.mxu0 0.0
    %v645 = vand.u32 %v72, 4294901760
    %646 = vmatmul.mubr.f32.gmra.mxu0 %v645
    %v647 = vpop.f32.mrf.mxu0
    %v648 = vadd.f32 %v563, %v647
    %v649 = vpop.f32.mrf.mxu0
    %650 = vmatprep.mubr.f32.mxu0 0.0
    %v651 = vand.u32 %v75, 4294901760
    %652 = vmatmul.mubr.f32.gmra.mxu0 %v651
    %v653 = vpop.f32.mrf.mxu0
    %v654 = vadd.f32 %v569, %v653
    %v655 = vpop.f32.mrf.mxu0
    %656 = vdwg.mxu0
    %657 = vst [vmem:[#allocation5] sm:$0xff] %v648
    %658 = vst [vmem:[#allocation5 + $0x8] sm:$0xff] %v654
    // Predicated region
    $region14: #{tpu_custom_call.1} parent=1 // pred_check
      _
    $region15: #{tpu_custom_call.1} parent=1 // pred_check_branch
      %660 = sbr.rel (0) target = $region17
    $region16: #{tpu_custom_call.1} parent=1 // pred_region
      %s662 = ssub.s32 256, 256
      %663 = vsyncadd [#allocation4], %s662
      %s664 = sshll.u32 [#allocation5], 4
      %s665 = int_to_ptr.vmem [resolvable:$true] %s664
      %670 = dma.vmem_to_hbm [thread:$0]  %s665, 256, %s2, [#allocation4], 128, 128, 8
    $region17: #{tpu_custom_call.1} parent=1 // pred_fallthru
      _
    // Predicated region
    $region18: #{tpu_custom_call.1} parent=1 // pred_check
      _
    $region19: #{tpu_custom_call.1} parent=1 // pred_check_branch
      %672 = sbr.rel (0) target = $region21
    $region20: #{tpu_custom_call.1} parent=1 // pred_region
      %673 = dma.done [#allocation4], 256
    $region21: #{tpu_custom_call.1} parent=1 // pred_fallthru
      _
    %674 = vsyncpa [#allocation3], 1
    %675 = vsyncpa [#allocation4], 1

</llo_original>
